<compile_context>
chip_gen: v5e
topology: v5e:2x2
jax: 0.10.0
libtpu: 0.0.40
codegen_flags: <defaults>
</compile_context>

<pallas_src>
import functools

import jax
import jax.numpy as jnp
from jax.experimental import pallas as pl
from jax.experimental.pallas import tpu as pltpu


def _round_up(n, m):
    return ((n + m - 1) // m) * m


def mlp_kernel(x_ref, w1_ref, b1_ref, w2_ref, b2_ref,
               w3_ref, b3_ref, w4_ref, b4_ref, o_ref):
    # x_ref: (TM, D) f32 tile in the input's natural (batch-major) layout.
    xb = x_ref[...].astype(jnp.bfloat16)                              # (TM, D)

    # Layer 1: contract the feature axis of both operands (w1 @ x^T) so the
    # batch lands in the lane dimension; all later tiles are lane-dense.
    h = jax.lax.dot_general(w1_ref[...], xb, (((1,), (1,)), ((), ())),
                            preferred_element_type=jnp.float32)       # (16, TM)
    h = jnp.maximum(h + b1_ref[...], 0.0).astype(jnp.bfloat16)

    h = jnp.dot(w2_ref[...], h, preferred_element_type=jnp.float32)   # (8, TM)
    h = jnp.maximum(h + b2_ref[...], 0.0).astype(jnp.bfloat16)

    h = jnp.dot(w3_ref[...], h, preferred_element_type=jnp.float32)   # (4, TM)
    h = jnp.maximum(h + b3_ref[...], 0.0).astype(jnp.bfloat16)

    # TODO(synk): if the MXU-push (vex) slot ever binds on v6e/v7x, layers 3-4
    # could be done as VPU broadcast-MACs instead of 256-wide matmuls.
    logits = jnp.dot(w4_ref[...], h, preferred_element_type=jnp.float32)  # (1, TM)
    o_ref[...] = jax.nn.sigmoid(logits + b4_ref[...])


def _choose_batch_tile(B, block_m):
    """Lane-dense batch tile; keep >=2 grid steps when B is large enough."""
    if B <= 128:
        return B                                   # single full-extent tile
    b128 = _round_up(B, 128)
    tm = min(_round_up(block_m, 128), b128)        # defensive multiple-of-128
    if tm == b128:                                 # would be one grid step:
        tm = max(128, _round_up(b128 // 2, 128))   # split so v7x's 2 TCs both work
    return tm


@functools.partial(jax.jit, static_argnames=("block_m",))
def simple_nn_forward(x, params, *, block_m=32768):
    """x: (B, input_dim) f32. params: PyTorch-layout w_i (out, in), b_i (out, 1)."""
    B, D = x.shape
    TM = _choose_batch_tile(B, block_m)
    grid = (pl.cdiv(B, TM),)

    args = (x,
            params["w1"].astype(jnp.bfloat16), params["b1"],
            params["w2"].astype(jnp.bfloat16), params["b2"],
            params["w3"].astype(jnp.bfloat16), params["b3"],
            params["w4"].astype(jnp.bfloat16), params["b4"])

    def resident(a):
        # Full-array block + constant index_map -> DMA'd once, VMEM-resident
        # across all grid steps.
        return pl.BlockSpec(a.shape, lambda i: (0, 0))

    in_specs = ([pl.BlockSpec((TM, D), lambda i: (i, 0))]   # streamed x tiles
                + [resident(a) for a in args[1:]])

    out_t = pl.pallas_call(
        mlp_kernel,
        grid=grid,
        out_shape=jax.ShapeDtypeStruct((1, B), jnp.float32),
        in_specs=in_specs,
        out_specs=pl.BlockSpec((1, TM), lambda i: (0, i)),
        compiler_params=pltpu.CompilerParams(
            dimension_semantics=("parallel",),
            vmem_limit_bytes=32 * 1024 * 1024),
    )(*args)

    # (1, B) lane-dense kernel output -> PyTorch-shaped (B, 1).
    return out_t.T


def init_params(key, input_dim):
    """PyTorch nn.Linear-style init: W (out, in), b (out, 1), U(+/- 1/sqrt(fan_in))."""
    dims = [(input_dim, 16), (16, 8), (8, 4), (4, 1)]
    params = {}
    for idx, (fan_in, fan_out) in enumerate(dims, start=1):
        key, kw, kb = jax.random.split(key, 3)
        bound = fan_in ** -0.5
        params[f"w{idx}"] = jax.random.uniform(
            kw, (fan_out, fan_in), jnp.float32, minval=-bound, maxval=bound)
        params[f"b{idx}"] = jax.random.uniform(
            kb, (fan_out, 1), jnp.float32, minval=-bound, maxval=bound)
    return params


def reference_forward(x, params):
    h = jnp.maximum(x @ params["w1"].T + params["b1"].T, 0.0)
    h = jnp.maximum(h @ params["w2"].T + params["b2"].T, 0.0)
    h = jnp.maximum(h @ params["w3"].T + params["b3"].T, 0.0)
    return jax.nn.sigmoid(h @ params["w4"].T + params["b4"].T)


if __name__ == "__main__":
    input_dim = 32
    key = jax.random.PRNGKey(0)
    key, kp = jax.random.split(key)
    params = init_params(kp, input_dim)

    # Small single-tile check (B=8 -> TM=8, one grid step).
    key, kx = jax.random.split(key)
    x = jax.random.normal(kx, (8, input_dim), jnp.float32)
    out = jax.block_until_ready(simple_nn_forward(x, params))
    ref = reference_forward(x, params)
    assert out.shape == (8, 1)
    # bf16 weights + bf16 streamed activations -> looser tolerance than pure f32.
    assert jnp.allclose(out, ref, atol=2e-2), float(jnp.max(jnp.abs(out - ref)))

    # Multi-tile + boundary-masked tail: B=300, block_m=128 -> 3 grid steps.
    key, kx2 = jax.random.split(key)
    x2 = jax.random.normal(kx2, (300, input_dim), jnp.float32)
    out2 = jax.block_until_ready(simple_nn_forward(x2, params, block_m=128))
    ref2 = reference_forward(x2, params)
    assert out2.shape == (300, 1)
    assert jnp.allclose(out2, ref2, atol=2e-2), float(jnp.max(jnp.abs(out2 - ref2)))

    print("KERNEL_OK")
</pallas_src>

<mosaic_0001>
module attributes {stable_mosaic.version = 11 : i64} {
  func.func @mlp_kernel(%arg0: i32, %arg1: memref<8x32xf32, #tpu.memory_space<vmem>>, %arg2: memref<16x32xbf16, #tpu.memory_space<vmem>>, %arg3: memref<16x1xf32, #tpu.memory_space<vmem>>, %arg4: memref<8x16xbf16, #tpu.memory_space<vmem>>, %arg5: memref<8x1xf32, #tpu.memory_space<vmem>>, %arg6: memref<4x8xbf16, #tpu.memory_space<vmem>>, %arg7: memref<4x1xf32, #tpu.memory_space<vmem>>, %arg8: memref<1x4xbf16, #tpu.memory_space<vmem>>, %arg9: memref<1x1xf32, #tpu.memory_space<vmem>>, %arg10: memref<1x8xf32, #tpu.memory_space<vmem>>) attributes {dimension_semantics = [#tpu.dimension_semantics<parallel>], iteration_bounds = array<i64: 1>, scalar_prefetch = 0 : i64, scratch_operands = 0 : i64, tpu.core_type = #tpu.core_type<tc>, window_params = [{transform_indices = @transform_0, window_bounds = array<i64: 8, 32>}, {pipeline_mode = #tpu.pipeline_mode<synchronous>, transform_indices = @transform_1, window_bounds = array<i64: 16, 32>}, {pipeline_mode = #tpu.pipeline_mode<synchronous>, transform_indices = @transform_2, window_bounds = array<i64: 16, 1>}, {pipeline_mode = #tpu.pipeline_mode<synchronous>, transform_indices = @transform_3, window_bounds = array<i64: 8, 16>}, {pipeline_mode = #tpu.pipeline_mode<synchronous>, transform_indices = @transform_4, window_bounds = array<i64: 8, 1>}, {pipeline_mode = #tpu.pipeline_mode<synchronous>, transform_indices = @transform_5, window_bounds = array<i64: 4, 8>}, {pipeline_mode = #tpu.pipeline_mode<synchronous>, transform_indices = @transform_6, window_bounds = array<i64: 4, 1>}, {pipeline_mode = #tpu.pipeline_mode<synchronous>, transform_indices = @transform_7, window_bounds = array<i64: 1, 4>}, {pipeline_mode = #tpu.pipeline_mode<synchronous>, transform_indices = @transform_8, window_bounds = array<i64: 1, 1>}, {transform_indices = @transform_9, window_bounds = array<i64: 1, 8>}]} {
    %c0 = arith.constant 0 : index
    %c0_0 = arith.constant 0 : index
    %0 = vector.load %arg1[%c0, %c0_0] : memref<8x32xf32, #tpu.memory_space<vmem>>, vector<8x32xf32>
    %1 = arith.truncf %0 : vector<8x32xf32> to vector<8x32xbf16>
    %c0_1 = arith.constant 0 : index
    %c0_2 = arith.constant 0 : index
    %2 = vector.load %arg2[%c0_1, %c0_2] : memref<16x32xbf16, #tpu.memory_space<vmem>>, vector<16x32xbf16>
    %cst = arith.constant dense<0.000000e+00> : vector<16x8xf32>
    %3 = tpu.matmul %2, %1, %cst {dimension_numbers = #tpu.dot_dimension_numbers<[1], [1], [0], [0], [0, 0, 1, 0], [], []>} : vector<16x32xbf16>, vector<8x32xbf16>, vector<16x8xf32> -> vector<16x8xf32>
    %c0_3 = arith.constant 0 : index
    %c0_4 = arith.constant 0 : index
    %4 = vector.load %arg3[%c0_3, %c0_4] : memref<16x1xf32, #tpu.memory_space<vmem>>, vector<16x1xf32>
    %5 = vector.broadcast %4 : vector<16x1xf32> to vector<16x8xf32>
    %6 = arith.addf %3, %5 : vector<16x8xf32>
    %cst_5 = arith.constant 0.000000e+00 : f32
    %7 = vector.broadcast %cst_5 : f32 to vector<16x8xf32>
    %8 = arith.maximumf %6, %7 : vector<16x8xf32>
    %9 = arith.truncf %8 : vector<16x8xf32> to vector<16x8xbf16>
    %c0_6 = arith.constant 0 : index
    %c0_7 = arith.constant 0 : index
    %10 = vector.load %arg4[%c0_6, %c0_7] : memref<8x16xbf16, #tpu.memory_space<vmem>>, vector<8x16xbf16>
    %cst_8 = arith.constant dense<0.000000e+00> : vector<8x8xf32>
    %11 = tpu.matmul %10, %9, %cst_8 {dimension_numbers = #tpu.dot_dimension_numbers<[1], [0], [0], [1], [0, 0, 1, 1], [], []>} : vector<8x16xbf16>, vector<16x8xbf16>, vector<8x8xf32> -> vector<8x8xf32>
    %c0_9 = arith.constant 0 : index
    %c0_10 = arith.constant 0 : index
    %12 = vector.load %arg5[%c0_9, %c0_10] : memref<8x1xf32, #tpu.memory_space<vmem>>, vector<8x1xf32>
    %13 = vector.broadcast %12 : vector<8x1xf32> to vector<8x8xf32>
    %14 = arith.addf %11, %13 : vector<8x8xf32>
    %cst_11 = arith.constant 0.000000e+00 : f32
    %15 = vector.broadcast %cst_11 : f32 to vector<8x8xf32>
    %16 = arith.maximumf %14, %15 : vector<8x8xf32>
    %17 = arith.truncf %16 : vector<8x8xf32> to vector<8x8xbf16>
    %c0_12 = arith.constant 0 : index
    %c0_13 = arith.constant 0 : index
    %18 = vector.load %arg6[%c0_12, %c0_13] : memref<4x8xbf16, #tpu.memory_space<vmem>>, vector<4x8xbf16>
    %cst_14 = arith.constant dense<0.000000e+00> : vector<4x8xf32>
    %19 = tpu.matmul %18, %17, %cst_14 {dimension_numbers = #tpu.dot_dimension_numbers<[1], [0], [0], [1], [0, 0, 1, 1], [], []>} : vector<4x8xbf16>, vector<8x8xbf16>, vector<4x8xf32> -> vector<4x8xf32>
    %c0_15 = arith.constant 0 : index
    %c0_16 = arith.constant 0 : index
    %20 = vector.load %arg7[%c0_15, %c0_16] : memref<4x1xf32, #tpu.memory_space<vmem>>, vector<4x1xf32>
    %21 = vector.broadcast %20 : vector<4x1xf32> to vector<4x8xf32>
    %22 = arith.addf %19, %21 : vector<4x8xf32>
    %cst_17 = arith.constant 0.000000e+00 : f32
    %23 = vector.broadcast %cst_17 : f32 to vector<4x8xf32>
    %24 = arith.maximumf %22, %23 : vector<4x8xf32>
    %25 = arith.truncf %24 : vector<4x8xf32> to vector<4x8xbf16>
    %c0_18 = arith.constant 0 : index
    %c0_19 = arith.constant 0 : index
    %26 = vector.load %arg8[%c0_18, %c0_19] : memref<1x4xbf16, #tpu.memory_space<vmem>>, vector<1x4xbf16>
    %cst_20 = arith.constant dense<0.000000e+00> : vector<1x8xf32>
    %27 = tpu.matmul %26, %25, %cst_20 {dimension_numbers = #tpu.dot_dimension_numbers<[1], [0], [0], [1], [0, 0, 1, 1], [], []>} : vector<1x4xbf16>, vector<4x8xbf16>, vector<1x8xf32> -> vector<1x8xf32>
    %c0_21 = arith.constant 0 : index
    %c0_22 = arith.constant 0 : index
    %28 = vector.load %arg9[%c0_21, %c0_22] : memref<1x1xf32, #tpu.memory_space<vmem>>, vector<1x1xf32>
    %29 = vector.broadcast %28 : vector<1x1xf32> to vector<1x8xf32>
    %30 = arith.addf %27, %29 : vector<1x8xf32>
    %31 = arith.negf %30 : vector<1x8xf32>
    %32 = math.exp %31 : vector<1x8xf32>
    %cst_23 = arith.constant 1.000000e+00 : f32
    %33 = vector.broadcast %cst_23 : f32 to vector<1x8xf32>
    %34 = arith.addf %33, %32 : vector<1x8xf32>
    %35 = arith.divf %33, %34 : vector<1x8xf32>
    %c0_24 = arith.constant 0 : index
    %c0_25 = arith.constant 0 : index
    %36 = vector.load %arg10[%c0_24, %c0_25] : memref<1x8xf32, #tpu.memory_space<vmem>>, vector<1x8xf32>
    tpu.vector_store %arg10[%c0_24, %c0_25], %35 {strides = array<i32>} : memref<1x8xf32, #tpu.memory_space<vmem>>, vector<1x8xf32>,
    return
  }
  func.func @transform_0(%arg0: i32) -> (i32, i32) {
    %c0_i32 = arith.constant 0 : i32
    %c0_i32_0 = arith.constant 0 : i32
    return %arg0, %c0_i32 : i32, i32
  }
  func.func @transform_1(%arg0: i32) -> (i32, i32) {
    %c0_i32 = arith.constant 0 : i32
    %c0_i32_0 = arith.constant 0 : i32
    %c0_i32_1 = arith.constant 0 : i32
    return %c0_i32, %c0_i32_0 : i32, i32
  }
  func.func @transform_2(%arg0: i32) -> (i32, i32) {
    %c0_i32 = arith.constant 0 : i32
    %c0_i32_0 = arith.constant 0 : i32
    %c0_i32_1 = arith.constant 0 : i32
    return %c0_i32, %c0_i32_0 : i32, i32
  }
  func.func @transform_3(%arg0: i32) -> (i32, i32) {
    %c0_i32 = arith.constant 0 : i32
    %c0_i32_0 = arith.constant 0 : i32
    %c0_i32_1 = arith.constant 0 : i32
    return %c0_i32, %c0_i32_0 : i32, i32
  }
  func.func @transform_4(%arg0: i32) -> (i32, i32) {
    %c0_i32 = arith.constant 0 : i32
    %c0_i32_0 = arith.constant 0 : i32
    %c0_i32_1 = arith.constant 0 : i32
    return %c0_i32, %c0_i32_0 : i32, i32
  }
  func.func @transform_5(%arg0: i32) -> (i32, i32) {
    %c0_i32 = arith.constant 0 : i32
    %c0_i32_0 = arith.constant 0 : i32
    %c0_i32_1 = arith.constant 0 : i32
    return %c0_i32, %c0_i32_0 : i32, i32
  }
  func.func @transform_6(%arg0: i32) -> (i32, i32) {
    %c0_i32 = arith.constant 0 : i32
    %c0_i32_0 = arith.constant 0 : i32
    %c0_i32_1 = arith.constant 0 : i32
    return %c0_i32, %c0_i32_0 : i32, i32
  }
  func.func @transform_7(%arg0: i32) -> (i32, i32) {
    %c0_i32 = arith.constant 0 : i32
    %c0_i32_0 = arith.constant 0 : i32
    %c0_i32_1 = arith.constant 0 : i32
    return %c0_i32, %c0_i32_0 : i32, i32
  }
  func.func @transform_8(%arg0: i32) -> (i32, i32) {
    %c0_i32 = arith.constant 0 : i32
    %c0_i32_0 = arith.constant 0 : i32
    %c0_i32_1 = arith.constant 0 : i32
    return %c0_i32, %c0_i32_0 : i32, i32
  }
  func.func @transform_9(%arg0: i32) -> (i32, i32) {
    %c0_i32 = arith.constant 0 : i32
    %c0_i32_0 = arith.constant 0 : i32
    return %c0_i32, %arg0 : i32, i32
  }
}

</mosaic_0001>

<llo_original>
// kernel: simple_nn_forward.1
$region0: #{simple_nn_forward.1}
  #allocation0 [shape = 'u32[]', space=smem, size = 0x4, offset = 0x4, fixed_abs, tag = 'smem constant byte address 0x4 - core index']
  #allocation1 [shape = 'u32[72,128]{1,0:T(1,128)}', space=vmem, size = 0x9000, scoped, tag = 'internal scratch']
  #allocation2 [shape = 'f32[1,1]{1,0:T(1,128)S(1)}', space=vmem, size = 0x200, scoped, tag = 'scoped memory for simple_nn_forward.1']
  %s0 = inlined_call_operand.vmem [shape: f32[8,32], index: 0, kind: input, shape index: {}]
  %s1 = inlined_call_operand.vmem [shape: bf16[16,32], index: 1, kind: input, shape index: {}]
  %s2 = inlined_call_operand.vmem [shape: f32[16,1], index: 2, kind: input, shape index: {}]
  %s3 = inlined_call_operand.vmem [shape: bf16[8,16], index: 3, kind: input, shape index: {}]
  %s4 = inlined_call_operand.vmem [shape: f32[8,1], index: 4, kind: input, shape index: {}]
  %s5 = inlined_call_operand.vmem [shape: bf16[4,8], index: 5, kind: input, shape index: {}]
  %s6 = inlined_call_operand.vmem [shape: f32[4,1], index: 6, kind: input, shape index: {}]
  %s7 = inlined_call_operand.vmem [shape: bf16[1,4], index: 7, kind: input, shape index: {}]
  %s8 = inlined_call_operand.<no memory space> [shape: f32[1,1], index: 8, kind: input, shape index: {}]
  %s9 = inlined_call_operand.hbm [shape: f32[1,8], index: 9, kind: output, shape index: {}]
  %s10 = sld [smem:[#allocation0]]
  $region46: #{simple_nn_forward.1} parent=0
    _
  %s12 = ssub.s32 1, %s10
  %s13 = scalar_select 0, %s12, %s10
  %v14 = vstv %s8
  %15 = vst [vmem:[#allocation2] sm:$0x1] %v14
  $region1: #{simple_nn_forward.1} parent=0
    #allocation3 [shape = 'u8[512]{0}', space=vmem, size = 0x400, scoped, tag = 'output window, operand 0, single buffered']
    #allocation4 [shape = 's32[1]{0}', space=sflag, size = 0x4, scoped, tag = 'scoped memory for simple_nn_forward.1']
    %16 = vsyncpa [#allocation4], 0
    // Predicated region
    $region2: #{simple_nn_forward.1} parent=1 // pred_check
      _
    $region3: #{simple_nn_forward.1} parent=1 // pred_check_branch
      %18 = sbr.rel (0) target = $region5
    $region4: #{simple_nn_forward.1} parent=1 // pred_region
      _
    $region5: #{simple_nn_forward.1} parent=1 // pred_fallthru
      _
    // Predicated region
    $region6: #{simple_nn_forward.1} parent=1 // pred_check
      _
    $region7: #{simple_nn_forward.1} parent=1 // pred_check_branch
      %20 = sbr.rel (0) target = $region9
    $region8: #{simple_nn_forward.1} parent=1 // pred_region
      _
    $region9: #{simple_nn_forward.1} parent=1 // pred_fallthru
      _
    // Predicated region
    $region10: #{simple_nn_forward.1} parent=1 // pred_check
      _
    $region11: #{simple_nn_forward.1} parent=1 // pred_check_branch
      %22 = sbr.rel (0) target = $region13
    $region12: #{simple_nn_forward.1} parent=1 // pred_region
      _
    $region13: #{simple_nn_forward.1} parent=1 // pred_fallthru
      _
    // Predicated region
    $region14: #{simple_nn_forward.1} parent=1 // pred_check
      _
    $region15: #{simple_nn_forward.1} parent=1 // pred_check_branch
      %24 = sbr.rel (0) target = $region17
    $region16: #{simple_nn_forward.1} parent=1 // pred_region
      _
    $region17: #{simple_nn_forward.1} parent=1 // pred_fallthru
      _
    // Predicated region
    $region18: #{simple_nn_forward.1} parent=1 // pred_check
      _
    $region19: #{simple_nn_forward.1} parent=1 // pred_check_branch
      %26 = sbr.rel (0) target = $region21
    $region20: #{simple_nn_forward.1} parent=1 // pred_region
      _
    $region21: #{simple_nn_forward.1} parent=1 // pred_fallthru
      _
    // Predicated region
    $region22: #{simple_nn_forward.1} parent=1 // pred_check
      _
    $region23: #{simple_nn_forward.1} parent=1 // pred_check_branch
      %28 = sbr.rel (0) target = $region25
    $region24: #{simple_nn_forward.1} parent=1 // pred_region
      _
    $region25: #{simple_nn_forward.1} parent=1 // pred_fallthru
      _
    // Predicated region
    $region26: #{simple_nn_forward.1} parent=1 // pred_check
      _
    $region27: #{simple_nn_forward.1} parent=1 // pred_check_branch
      %30 = sbr.rel (0) target = $region29
    $region28: #{simple_nn_forward.1} parent=1 // pred_region
      _
    $region29: #{simple_nn_forward.1} parent=1 // pred_fallthru
      _
    // Predicated region
    $region30: #{simple_nn_forward.1} parent=1 // pred_check
      _
    $region31: #{simple_nn_forward.1} parent=1 // pred_check_branch
      %32 = sbr.rel (0) target = $region33
    $region32: #{simple_nn_forward.1} parent=1 // pred_region
      _
    $region33: #{simple_nn_forward.1} parent=1 // pred_fallthru
      _
    // Predicated region
    $region34: #{simple_nn_forward.1} parent=1 // pred_check
      _
    $region35: #{simple_nn_forward.1} parent=1 // pred_check_branch
      %34 = sbr.rel (0) target = $region37
    $region36: #{simple_nn_forward.1} parent=1 // pred_region
      _
    $region37: #{simple_nn_forward.1} parent=1 // pred_fallthru
      _
    %v36 = vld [vmem:[%s0] sm:$0xff]
    %v37 = vpack.c.bf16 %v36, %v36
    %v38 = vld [vmem:[%s1] sm:$0xf]
    %v39 = vld [vmem:[%s1 + $0x4] sm:$0xf]
    %v40 = vld [vmem:[%s2] sm:$0xff]
    %v41 = vld [vmem:[%s2 + $0x8] sm:$0xff]
    %43 = vset.pattern.permute.xlu0 0
    %44 = vperm.xlu0 %43, %v40
    %v45 = vpop.permute.xlu0 %44
    %48 = vset.pattern.permute.xlu0 0
    %49 = vperm.xlu0 %48, %v41
    %v50 = vpop.permute.xlu0 %49
    %v54 = vunpack.c.l.b16 %v38
    %v55 = vunpack.c.l.b16 %v39
    %v56 = vpack.c.b16 %v55, %v54
    %vm57 = vcmask 261120
    %v59 = vsel %vm57, %v56, 0
    %v62 = vsel %vm57, %v37, 0
    %64 = vmatpush.bf16.xpose.msra.mxu0 0
    %65 = vmatpush.bf16.xpose.msra.mxu0 0
    %66 = vmatpush.bf16.xpose.msra.mxu0 0
    %67 = vmatpush.bf16.xpose.msra.mxu0 0
    %68 = vmatpush.bf16.xpose.msra.mxu0 0
    %69 = vmatpush.bf16.xpose.msra.mxu0 0
    %70 = vmatpush.bf16.xpose.msra.mxu0 0
    %71 = vmatpush.bf16.xpose.msra.mxu0 %v62
    %72 = vmatmul.bf16.gmra.mxu0 %v59
    %v73 = vpop.f32.mrf.mxu0
    %v74 = vadd.f32 %v45, %v73
    %v75 = vpop.f32.mrf.mxu0
    %v76 = vadd.f32 %v50, %v75
    %77 = vdwg.mxu0
    %v78 = vmax.f32 %v74, 0.0
    %v79 = vmax.f32 %v76, 0.0
    %v80 = vpack.c.bf16 %v79, %v78
    %v81 = vld [vmem:[%s3] sm:$0xf]
    %v82 = vld [vmem:[%s4] sm:$0xff]
    %84 = vset.pattern.permute.xlu0 0
    %85 = vperm.xlu0 %84, %v82
    %v86 = vpop.permute.xlu0 %85
    %vm88 = vcmask 130048
    %v90 = vsel %vm88, %v81, 0
    %92 = vmatpush.bf16.msra.mxu0 0
    %93 = vmatpush.bf16.msra.mxu0 0
    %94 = vmatpush.bf16.msra.mxu0 0
    %95 = vmatpush.bf16.msra.mxu0 0
    %96 = vmatpush.bf16.msra.mxu0 0
    %97 = vmatpush.bf16.msra.mxu0 0
    %98 = vmatpush.bf16.msra.mxu0 0
    %99 = vmatpush.bf16.msra.mxu0 %v80
    %100 = vmatmul.bf16.gmra.mxu0 %v90
    %v101 = vpop.f32.mrf.mxu0
    %v102 = vadd.f32 %v86, %v101
    %v103 = vpop.f32.mrf.mxu0
    %104 = vdwg.mxu0
    %v105 = vmax.f32 %v102, 0.0
    %v106 = vpack.c.bf16 %v105, %v105
    %v107 = vld [vmem:[%s5] sm:$0x3]
    %v108 = vld [vmem:[%s6] sm:$0xf]
    %110 = vset.pattern.permute.xlu0 0
    %111 = vperm.xlu0 %110, %v108
    %v112 = vpop.permute.xlu0 %111
    %vm114 = vcmask 64512
    %v116 = vsel %vm114, %v107, 0
    %vm118 = vcmask 1043456
    %v120 = vsel %vm118, %v106, 0
    %122 = vmatpush.bf16.msra.mxu0 0
    %123 = vmatpush.bf16.msra.mxu0 0
    %124 = vmatpush.bf16.msra.mxu0 0
    %125 = vmatpush.bf16.msra.mxu0 0
    %126 = vmatpush.bf16.msra.mxu0 0
    %127 = vmatpush.bf16.msra.mxu0 0
    %128 = vmatpush.bf16.msra.mxu0 0
    %129 = vmatpush.bf16.msra.mxu0 %v120
    %130 = vmatmul.bf16.gmra.mxu0 %v116
    %v131 = vpop.f32.mrf.mxu0
    %v132 = vadd.f32 %v112, %v131
    %v133 = vpop.f32.mrf.mxu0
    %134 = vdwg.mxu0
    %v135 = vmax.f32 %v132, 0.0
    %v136 = vpack.c.bf16 %v135, %v135
    %v137 = vld [vmem:[%s7] sm:$0x1]
    %v138 = vld [vmem:[#allocation2] sm:$0x1]
    %140 = vset.pattern.permute.xlu0 0
    %141 = vperm.xlu0 %140, %v138
    %v142 = vpop.permute.xlu0 %141
    %v144 = vperm.slane %v142, 0
    %vm145 = vcmask 31744
    %v147 = vsel %vm145, %v137, 0
    %vm149 = vcmask 1041408
    %v151 = vsel %vm149, %v136, 0
    %153 = vmatpush.bf16.msra.mxu0 0
    %154 = vmatpush.bf16.msra.mxu0 0
    %155 = vmatpush.bf16.msra.mxu0 0
    %156 = vmatpush.bf16.msra.mxu0 0
    %157 = vmatpush.bf16.msra.mxu0 0
    %158 = vmatpush.bf16.msra.mxu0 0
    %159 = vmatpush.bf16.msra.mxu0 0
    %160 = vmatpush.bf16.msra.mxu0 %v151
    %161 = vmatmul.bf16.gmra.mxu0 %v147
    %v162 = vpop.f32.mrf.mxu0
    %v163 = vadd.f32 %v144, %v162
    %v164 = vpop.f32.mrf.mxu0
    %165 = vdwg.mxu0
    %v166 = vxor.u32 %v163, 2147483648
    %v167 = vmul.f32 %v166, 1.442695
    %v168 = vpow.pop %v167
    %v169 = vadd.f32 %v168, 1.0
    %v170 = vrcp.pop %v169
    %v171 = vmul.f32 %v169, %v170
    %v172 = vsub.f32 1.0, %v171
    %v173 = vmul.f32 %v170, %v172
    %v174 = vadd.f32 %v170, %v173
    %vm175 = vweird.f32 %v169
    %vm176 = vweird.f32 %v170
    %vm177 = vmor %vm175, %vm176
    %v178 = vsel %vm177, %v170, %v174
    %v179 = vand.u32 2147483647, %v169
    %vm180 = vcmp.eq.f32.partialorder %v179, 8.507059e+37
    %v181 = vand.u32 %v169, 2147483648
    %v182 = vor.u32 1.1754944e-38, %v181
    %v183 = vsel %vm180, %v182, %v178
    %v184 = vmul.f32 1.0, %v183
    %vm185 = vcmask 57344
    %186 = vst.msk [vmem:[#allocation3] sm:$0x1] %vm185, %v184
    // Predicated region
    $region38: #{simple_nn_forward.1} parent=1 // pred_check
      _
    $region39: #{simple_nn_forward.1} parent=1 // pred_check_branch
      %188 = sbr.rel (0) target = $region41
    $region40: #{simple_nn_forward.1} parent=1 // pred_region
      %190 = vsyncadd [#allocation4], 0
      %s192 = sshll.u32 [#allocation3], 4
      %s193 = int_to_ptr.vmem [resolvable:$true] %s192
      %s194 = sshll.u32 %s9, 4
      %s195 = int_to_ptr.hbm [resolvable:$true] %s194
      %197 = dma.vmem_to_hbm [thread:$0]  %s193, 16, %s195, [#allocation4]
    $region41: #{simple_nn_forward.1} parent=1 // pred_fallthru
      _
    // Predicated region
    $region42: #{simple_nn_forward.1} parent=1 // pred_check
      _
    $region43: #{simple_nn_forward.1} parent=1 // pred_check_branch
      %199 = sbr.rel (0) target = $region45
    $region44: #{simple_nn_forward.1} parent=1 // pred_region
      %201 = dma.done [#allocation4], 16
    $region45: #{simple_nn_forward.1} parent=1 // pred_fallthru
      _
    %202 = vsyncpa [#allocation4], 1

</llo_original>
